<compile_context>
chip_gen: v7x
topology: tpu7x:2x2x1
jax: 0.10.0
libtpu: 0.0.40
codegen_flags: <defaults>
</compile_context>

<pallas_src>
import jax
import jax.numpy as jnp
from jax.experimental import pallas as pl
from jax.experimental.pallas import tpu as pltpu


def _critic_kernel(xa_ref, w1_ref, b1_ref, w2_ref, b2_ref, w3_ref, b3_ref,
                   out_ref):
    # fc1: bf16 x bf16 -> f32 accumulate (single merged matmul for [x, a]).
    h1 = jnp.dot(xa_ref[...], w1_ref[...], preferred_element_type=jnp.float32)
    h1 = jnp.maximum(h1 + b1_ref[...], 0.0)                      # f32 relu

    # fc2: cast activation to bf16 for the MXU, accumulate in f32.
    h2 = jnp.dot(h1.astype(jnp.bfloat16), w2_ref[...],
                 preferred_element_type=jnp.float32)
    h2 = jnp.maximum(h2 + b2_ref[...], 0.0)                      # f32 relu

    # fc3 (out features = 1): VPU multiply + row reduce instead of an N=1
    # MXU matmul (avoids 1/256-lane MXU utilization).
    q = jnp.sum(h2 * w3_ref[...], axis=-1, keepdims=True) + b3_ref[...]
    out_ref[...] = q.astype(out_ref.dtype)


def critic_forward(x, a, params, *, bm=256):
    """x: (B, input_size) f32, a: (B, action_size) or (B,) f32 -> (B, 1) f32."""
    if a.ndim != 2:                       # mirrors `a.unsqueeze(1)` in PyTorch
        a = a[:, None]
    w1, b1, w2, b2, w3, b3 = params

    # Merge the concat into the input: one (B, K) bf16 operand, one W1.
    xa = jnp.concatenate([x, a], axis=1).astype(jnp.bfloat16)
    B, K = xa.shape
    H1 = w1.shape[1]
    H2 = w2.shape[1]

    # Batch tiling: bm per grid step (weights stay resident across steps).
    bm = min(bm, max(8, B))
    n_blocks = pl.cdiv(B, bm)
    Bp = n_blocks * bm
    if Bp != B:
        xa = jnp.pad(xa, ((0, Bp - B), (0, 0)))

    flops = 2 * Bp * (K * H1 + H1 * H2 + H2)
    bytes_accessed = (xa.size * 2 + w1.size * 2 + w2.size * 2
                      + (b1.size + b2.size + w3.size + b3.size) * 4
                      + Bp * 4)
    cost = pl.CostEstimate(flops=flops, transcendentals=0,
                           bytes_accessed=bytes_accessed)

    out = pl.pallas_call(
        _critic_kernel,
        out_shape=jax.ShapeDtypeStruct((Bp, 1), jnp.float32),
        grid=(n_blocks,),
        in_specs=[
            pl.BlockSpec((bm, K), lambda i: (i, 0)),    # xa tile (pipelined)
            pl.BlockSpec((K, H1), lambda i: (0, 0)),    # W1 (resident, bf16)
            pl.BlockSpec((1, H1), lambda i: (0, 0)),    # b1 (f32)
            pl.BlockSpec((H1, H2), lambda i: (0, 0)),   # W2 (resident, bf16)
            pl.BlockSpec((1, H2), lambda i: (0, 0)),    # b2 (f32)
            pl.BlockSpec((1, H2), lambda i: (0, 0)),    # w3 row (f32)
            pl.BlockSpec((1, 1), lambda i: (0, 0)),     # b3 (f32)
        ],
        out_specs=pl.BlockSpec((bm, 1), lambda i: (i, 0)),
        compiler_params=pltpu.CompilerParams(
            dimension_semantics=("parallel",)),
        cost_estimate=cost,
    )(xa, w1, b1, w2, b2, w3, b3)
    return out[:B]


def init_params(key, input_size, action_size, h1=400, h2=300):
    """Deterministic synthetic parameters (uniform, like torch Linear default scale).

    Weights are stored (in, out) so the kernel computes y = x @ W + b.  W1/W2
    are cast to bfloat16 (MXU input dtype, halves weight DMA); biases and the
    tiny fc3 row stay f32.
    """
    ks = jax.random.split(key, 6)

    def lin(kw, kb, fan_in, fan_out):
        bound = 1.0 / jnp.sqrt(fan_in)
        w = jax.random.uniform(kw, (fan_in, fan_out), jnp.float32, -bound, bound)
        b = jax.random.uniform(kb, (1, fan_out), jnp.float32, -bound, bound)
        return w, b

    w1, b1 = lin(ks[0], ks[1], input_size + action_size, h1)
    w2, b2 = lin(ks[2], ks[3], h1, h2)
    w3, b3 = lin(ks[4], ks[5], h2, 1)
    return (w1.astype(jnp.bfloat16), b1,
            w2.astype(jnp.bfloat16), b2,
            w3.T, b3)                       # w3 stored as a (1, h2) row


def _reference(x, a, params):
    """Pure-JAX reference that mirrors the kernel's bf16 rounding exactly."""
    if a.ndim != 2:
        a = a[:, None]
    w1, b1, w2, b2, w3, b3 = params
    xa = jnp.concatenate([x, a], axis=1).astype(jnp.bfloat16).astype(jnp.float32)
    h = jnp.maximum(xa @ w1.astype(jnp.float32) + b1, 0.0)
    h = h.astype(jnp.bfloat16).astype(jnp.float32)
    h = jnp.maximum(h @ w2.astype(jnp.float32) + b2, 0.0)
    return jnp.sum(h * w3, axis=-1, keepdims=True) + b3


if __name__ == "__main__":
    key = jax.random.PRNGKey(0)
    k_par, k_x, k_a = jax.random.split(key, 3)

    batch = 8
    input_size = 16      # number of state features
    action_size = 4      # number of action dims

    params = init_params(k_par, input_size, action_size)
    x = jax.random.normal(k_x, (batch, input_size), jnp.float32)
    a = jax.random.normal(k_a, (batch, action_size), jnp.float32)

    q = critic_forward(x, a, params)
    jax.block_until_ready(q)

    q_ref = _reference(x, a, params)
    assert q.shape == (batch, 1)
    assert jnp.allclose(q, q_ref, atol=2e-3, rtol=2e-3), "mismatch vs JAX reference"

    print("KERNEL_OK")
</pallas_src>

<mosaic_0001>
module attributes {stable_mosaic.version = 11 : i64} {
  func.func @_critic_kernel(%arg0: i32, %arg1: memref<8x20xbf16, #tpu.memory_space<vmem>>, %arg2: memref<20x400xbf16, #tpu.memory_space<vmem>>, %arg3: memref<1x400xf32, #tpu.memory_space<vmem>>, %arg4: memref<400x300xbf16, #tpu.memory_space<vmem>>, %arg5: memref<1x300xf32, #tpu.memory_space<vmem>>, %arg6: memref<1x300xf32, #tpu.memory_space<vmem>>, %arg7: memref<1x1xf32, #tpu.memory_space<vmem>>, %arg8: memref<8x1xf32, #tpu.memory_space<vmem>>) attributes {dimension_semantics = [#tpu.dimension_semantics<parallel>], iteration_bounds = array<i64: 1>, scalar_prefetch = 0 : i64, scratch_operands = 0 : i64, tpu.core_type = #tpu.core_type<tc>, window_params = [{transform_indices = @transform_0, window_bounds = array<i64: 8, 20>}, {pipeline_mode = #tpu.pipeline_mode<synchronous>, transform_indices = @transform_1, window_bounds = array<i64: 20, 400>}, {pipeline_mode = #tpu.pipeline_mode<synchronous>, transform_indices = @transform_2, window_bounds = array<i64: 1, 400>}, {pipeline_mode = #tpu.pipeline_mode<synchronous>, transform_indices = @transform_3, window_bounds = array<i64: 400, 300>}, {pipeline_mode = #tpu.pipeline_mode<synchronous>, transform_indices = @transform_4, window_bounds = array<i64: 1, 300>}, {pipeline_mode = #tpu.pipeline_mode<synchronous>, transform_indices = @transform_5, window_bounds = array<i64: 1, 300>}, {pipeline_mode = #tpu.pipeline_mode<synchronous>, transform_indices = @transform_6, window_bounds = array<i64: 1, 1>}, {transform_indices = @transform_7, window_bounds = array<i64: 8, 1>}]} {
    %c0 = arith.constant 0 : index
    %c0_0 = arith.constant 0 : index
    %0 = vector.load %arg1[%c0, %c0_0] : memref<8x20xbf16, #tpu.memory_space<vmem>>, vector<8x20xbf16>
    %c0_1 = arith.constant 0 : index
    %c0_2 = arith.constant 0 : index
    %1 = vector.load %arg2[%c0_1, %c0_2] : memref<20x400xbf16, #tpu.memory_space<vmem>>, vector<20x400xbf16>
    %cst = arith.constant dense<0.000000e+00> : vector<8x400xf32>
    %2 = tpu.matmul %0, %1, %cst {dimension_numbers = #tpu.dot_dimension_numbers<[1], [0], [0], [1], [0, 0, 1, 1], [], []>} : vector<8x20xbf16>, vector<20x400xbf16>, vector<8x400xf32> -> vector<8x400xf32>
    %c0_3 = arith.constant 0 : index
    %c0_4 = arith.constant 0 : index
    %3 = vector.load %arg3[%c0_3, %c0_4] : memref<1x400xf32, #tpu.memory_space<vmem>>, vector<1x400xf32>
    %4 = vector.broadcast %3 : vector<1x400xf32> to vector<8x400xf32>
    %5 = arith.addf %2, %4 : vector<8x400xf32>
    %cst_5 = arith.constant 0.000000e+00 : f32
    %6 = vector.broadcast %cst_5 : f32 to vector<8x400xf32>
    %7 = arith.maximumf %5, %6 : vector<8x400xf32>
    %8 = arith.truncf %7 : vector<8x400xf32> to vector<8x400xbf16>
    %c0_6 = arith.constant 0 : index
    %c0_7 = arith.constant 0 : index
    %9 = vector.load %arg4[%c0_6, %c0_7] : memref<400x300xbf16, #tpu.memory_space<vmem>>, vector<400x300xbf16>
    %cst_8 = arith.constant dense<0.000000e+00> : vector<8x300xf32>
    %10 = tpu.matmul %8, %9, %cst_8 {dimension_numbers = #tpu.dot_dimension_numbers<[1], [0], [0], [1], [0, 0, 1, 1], [], []>} : vector<8x400xbf16>, vector<400x300xbf16>, vector<8x300xf32> -> vector<8x300xf32>
    %c0_9 = arith.constant 0 : index
    %c0_10 = arith.constant 0 : index
    %11 = vector.load %arg5[%c0_9, %c0_10] : memref<1x300xf32, #tpu.memory_space<vmem>>, vector<1x300xf32>
    %12 = vector.broadcast %11 : vector<1x300xf32> to vector<8x300xf32>
    %13 = arith.addf %10, %12 : vector<8x300xf32>
    %cst_11 = arith.constant 0.000000e+00 : f32
    %14 = vector.broadcast %cst_11 : f32 to vector<8x300xf32>
    %15 = arith.maximumf %13, %14 : vector<8x300xf32>
    %c0_12 = arith.constant 0 : index
    %c0_13 = arith.constant 0 : index
    %16 = vector.load %arg6[%c0_12, %c0_13] : memref<1x300xf32, #tpu.memory_space<vmem>>, vector<1x300xf32>
    %17 = vector.broadcast %16 : vector<1x300xf32> to vector<8x300xf32>
    %18 = arith.mulf %15, %17 : vector<8x300xf32>
    %cst_14 = arith.constant dense<0.000000e+00> : vector<8xf32>
    %19 = vector.multi_reduction <add>, %18, %cst_14 [1] : vector<8x300xf32> to vector<8xf32>
    %20 = vector.shape_cast %19 : vector<8xf32> to vector<8x1xf32>
    %c0_15 = arith.constant 0 : index
    %c0_16 = arith.constant 0 : index
    %21 = vector.load %arg7[%c0_15, %c0_16] : memref<1x1xf32, #tpu.memory_space<vmem>>, vector<1x1xf32>
    %22 = vector.broadcast %21 : vector<1x1xf32> to vector<8x1xf32>
    %23 = arith.addf %20, %22 : vector<8x1xf32>
    %c0_17 = arith.constant 0 : index
    %c0_18 = arith.constant 0 : index
    %24 = vector.load %arg8[%c0_17, %c0_18] : memref<8x1xf32, #tpu.memory_space<vmem>>, vector<8x1xf32>
    tpu.vector_store %arg8[%c0_17, %c0_18], %23 {strides = array<i32>} : memref<8x1xf32, #tpu.memory_space<vmem>>, vector<8x1xf32>,
    return
  }
  func.func @transform_0(%arg0: i32) -> (i32, i32) {
    %c0_i32 = arith.constant 0 : i32
    %c0_i32_0 = arith.constant 0 : i32
    return %arg0, %c0_i32 : i32, i32
  }
  func.func @transform_1(%arg0: i32) -> (i32, i32) {
    %c0_i32 = arith.constant 0 : i32
    %c0_i32_0 = arith.constant 0 : i32
    %c0_i32_1 = arith.constant 0 : i32
    return %c0_i32, %c0_i32_0 : i32, i32
  }
  func.func @transform_2(%arg0: i32) -> (i32, i32) {
    %c0_i32 = arith.constant 0 : i32
    %c0_i32_0 = arith.constant 0 : i32
    %c0_i32_1 = arith.constant 0 : i32
    return %c0_i32, %c0_i32_0 : i32, i32
  }
  func.func @transform_3(%arg0: i32) -> (i32, i32) {
    %c0_i32 = arith.constant 0 : i32
    %c0_i32_0 = arith.constant 0 : i32
    %c0_i32_1 = arith.constant 0 : i32
    return %c0_i32, %c0_i32_0 : i32, i32
  }
  func.func @transform_4(%arg0: i32) -> (i32, i32) {
    %c0_i32 = arith.constant 0 : i32
    %c0_i32_0 = arith.constant 0 : i32
    %c0_i32_1 = arith.constant 0 : i32
    return %c0_i32, %c0_i32_0 : i32, i32
  }
  func.func @transform_5(%arg0: i32) -> (i32, i32) {
    %c0_i32 = arith.constant 0 : i32
    %c0_i32_0 = arith.constant 0 : i32
    %c0_i32_1 = arith.constant 0 : i32
    return %c0_i32, %c0_i32_0 : i32, i32
  }
  func.func @transform_6(%arg0: i32) -> (i32, i32) {
    %c0_i32 = arith.constant 0 : i32
    %c0_i32_0 = arith.constant 0 : i32
    %c0_i32_1 = arith.constant 0 : i32
    return %c0_i32, %c0_i32_0 : i32, i32
  }
  func.func @transform_7(%arg0: i32) -> (i32, i32) {
    %c0_i32 = arith.constant 0 : i32
    %c0_i32_0 = arith.constant 0 : i32
    return %arg0, %c0_i32 : i32, i32
  }
}

</mosaic_0001>

<llo_original>
// kernel: tpu_custom_call.1
$region0: #{tpu_custom_call.1}
  #allocation0 [shape = 'u32[]', space=smem, size = 0x4, offset = 0x4, fixed_abs, tag = 'smem constant byte address 0x4 - core index']
  #allocation1 [shape = 'u32[144,128]{1,0:T(1,128)}', space=vmem, size = 0x12000, scoped, tag = 'internal scratch']
  #allocation2 [shape = 'f32[1,1]{1,0:T(1,128)S(1)}', space=vmem, size = 0x200, scoped, tag = 'scoped memory for tpu_custom_call.1']
  %s0 = inlined_call_operand.hbm [shape: bf16[8,20], index: 0, kind: input, shape index: {}]
  %s1 = inlined_call_operand.hbm [shape: bf16[20,400], index: 1, kind: input, shape index: {}]
  %s2 = inlined_call_operand.vmem [shape: f32[1,400], index: 2, kind: input, shape index: {}]
  %s3 = inlined_call_operand.hbm [shape: bf16[400,300], index: 3, kind: input, shape index: {}]
  %s4 = inlined_call_operand.vmem [shape: f32[1,300], index: 4, kind: input, shape index: {}]
  %s5 = inlined_call_operand.vmem [shape: f32[1,300], index: 5, kind: input, shape index: {}]
  %s6 = inlined_call_operand.<no memory space> [shape: f32[1,1], index: 6, kind: input, shape index: {}]
  %s7 = inlined_call_operand.vmem [shape: f32[8,1], index: 7, kind: output, shape index: {}]
  %s8 = sld [smem:[#allocation0]]
  $region50: #{tpu_custom_call.1} parent=0
    _
  %s10 = ssub.s32 1, %s8
  %s11 = scalar_select 0, %s10, %s8
  %v12 = vstv %s6
  %13 = vst [vmem:[#allocation2] sm:$0x1] %v12
  $region1: #{tpu_custom_call.1} parent=0
    #allocation3 [shape = 'u8[2048]{0}', space=vmem, size = 0x800, scoped, tag = 'input window, operand 0, single buffered']
    #allocation4 [shape = 's32[1]{0}', space=sflag, size = 0x4, scoped, tag = 'scoped memory for tpu_custom_call.1']
    #allocation5 [shape = 'u8[24576]{0}', space=vmem, size = 0x6000, scoped, tag = 'input window, operand 1, single buffered']
    #allocation6 [shape = 's32[1]{0}', space=sflag, size = 0x4, scoped, tag = 'scoped memory for tpu_custom_call.1']
    #allocation7 [shape = 'u8[307200]{0}', space=vmem, size = 0x4b000, scoped, tag = 'input window, operand 3, single buffered']
    %14 = vsyncpa [#allocation4], 0
    %15 = vsyncpa [#allocation6], 0
    // Predicated region
    $region2: #{tpu_custom_call.1} parent=1 // pred_check
      _
    $region3: #{tpu_custom_call.1} parent=1 // pred_check_branch
      %17 = sbr.rel (0) target = $region5
    $region4: #{tpu_custom_call.1} parent=1 // pred_region
      %s19 = ssub.s32 64, 64
      %20 = vsyncadd [#allocation4], %s19
      %s22 = sshll.u32 [#allocation3], 4
      %s23 = int_to_ptr.vmem [resolvable:$true] %s22
      %25 = dma.hbm_to_vmem [thread:$0]  %s0, 64, %s23, [#allocation4]
    $region5: #{tpu_custom_call.1} parent=1 // pred_fallthru
      _
    // Predicated region
    $region6: #{tpu_custom_call.1} parent=1 // pred_check
      _
    $region7: #{tpu_custom_call.1} parent=1 // pred_check_branch
      %27 = sbr.rel (0) target = $region9
    $region8: #{tpu_custom_call.1} parent=1 // pred_region
      %s29 = ssub.s32 768, 768
      %30 = vsyncadd [#allocation6], %s29
      %s31 = sshll.u32 [#allocation5], 4
      %s32 = int_to_ptr.vmem [resolvable:$true] %s31
      %37 = dma.hbm_to_vmem [thread:$0]  %s1, 768, %s32, [#allocation6], 256, 256, 16
    $region9: #{tpu_custom_call.1} parent=1 // pred_fallthru
      _
    // Predicated region
    $region10: #{tpu_custom_call.1} parent=1 // pred_check
      _
    $region11: #{tpu_custom_call.1} parent=1 // pred_check_branch
      %39 = sbr.rel (0) target = $region13
    $region12: #{tpu_custom_call.1} parent=1 // pred_region
      _
    $region13: #{tpu_custom_call.1} parent=1 // pred_fallthru
      _
    // Predicated region
    $region14: #{tpu_custom_call.1} parent=1 // pred_check
      _
    $region15: #{tpu_custom_call.1} parent=1 // pred_check_branch
      %41 = sbr.rel (0) target = $region17
    $region16: #{tpu_custom_call.1} parent=1 // pred_region
      %s43 = ssub.s32 9600, 9600
      %44 = vsyncadd [#allocation6], %s43
      %s45 = sshll.u32 [#allocation7], 4
      %s46 = int_to_ptr.vmem [resolvable:$true] %s45
      %51 = dma.hbm_to_vmem [thread:$0]  %s3, 9600, %s46, [#allocation6], 192, 192, 12
    $region17: #{tpu_custom_call.1} parent=1 // pred_fallthru
      _
    // Predicated region
    $region18: #{tpu_custom_call.1} parent=1 // pred_check
      _
    $region19: #{tpu_custom_call.1} parent=1 // pred_check_branch
      %53 = sbr.rel (0) target = $region21
    $region20: #{tpu_custom_call.1} parent=1 // pred_region
      _
    $region21: #{tpu_custom_call.1} parent=1 // pred_fallthru
      _
    // Predicated region
    $region22: #{tpu_custom_call.1} parent=1 // pred_check
      _
    $region23: #{tpu_custom_call.1} parent=1 // pred_check_branch
      %55 = sbr.rel (0) target = $region25
    $region24: #{tpu_custom_call.1} parent=1 // pred_region
      _
    $region25: #{tpu_custom_call.1} parent=1 // pred_fallthru
      _
    // Predicated region
    $region26: #{tpu_custom_call.1} parent=1 // pred_check
      _
    $region27: #{tpu_custom_call.1} parent=1 // pred_check_branch
      %57 = sbr.rel (0) target = $region29
    $region28: #{tpu_custom_call.1} parent=1 // pred_region
      _
    $region29: #{tpu_custom_call.1} parent=1 // pred_fallthru
      _
    // Predicated region
    $region30: #{tpu_custom_call.1} parent=1 // pred_check
      _
    $region31: #{tpu_custom_call.1} parent=1 // pred_check_branch
      %59 = sbr.rel (0) target = $region33
    $region32: #{tpu_custom_call.1} parent=1 // pred_region
      %60 = dma.done [#allocation4], 64
    $region33: #{tpu_custom_call.1} parent=1 // pred_fallthru
      _
    // Predicated region
    $region34: #{tpu_custom_call.1} parent=1 // pred_check
      _
    $region35: #{tpu_custom_call.1} parent=1 // pred_check_branch
      %62 = sbr.rel (0) target = $region37
    $region36: #{tpu_custom_call.1} parent=1 // pred_region
      %63 = dma.done [#allocation6], 768
    $region37: #{tpu_custom_call.1} parent=1 // pred_fallthru
      _
    // Predicated region
    $region38: #{tpu_custom_call.1} parent=1 // pred_check
      _
    $region39: #{tpu_custom_call.1} parent=1 // pred_check_branch
      %65 = sbr.rel (0) target = $region41
    $region40: #{tpu_custom_call.1} parent=1 // pred_region
      %66 = dma.done [#allocation6], 9600
    $region41: #{tpu_custom_call.1} parent=1 // pred_fallthru
      _
    %v68 = vld [vmem:[#allocation3] sm:$0xf]
    %v69 = vld [vmem:[#allocation5] sm:$0xff]
    %v70 = vld [vmem:[#allocation5 + $0x8] sm:$0xff]
    %v71 = vld [vmem:[#allocation5 + $0x10] sm:$0xff]
    %v72 = vld [vmem:[#allocation5 + $0x18] sm:$0xff]
    %v73 = vld [vmem:[#allocation5 + $0x20] sm:$0x33]
    %v74 = vld [vmem:[#allocation5 + $0x28] sm:$0x33]
    %v75 = vld [vmem:[%s2] sm:$0xf]
    %v77 = vlaneseq
    %v78 = vshrl.u32 %v77, 7
    %v79 = vsub.s32 0, %v78
    %v80 = vrot.slane %v75, %v79
    %v81 = vlaneseq
    %v82 = vshrl.u32 %v81, 7
    %v83 = vsub.s32 1, %v82
    %v84 = vrot.slane %v75, %v83
    %v85 = vlaneseq
    %v86 = vshrl.u32 %v85, 7
    %v87 = vsub.s32 2, %v86
    %v88 = vrot.slane %v75, %v87
    %v89 = vlaneseq
    %v90 = vshrl.u32 %v89, 7
    %v91 = vsub.s32 3, %v90
    %v92 = vrot.slane %v75, %v91
    %v103 = vunpack.c.l.b16 %v69
    %v104 = vunpack.c.h.b16 %v69
    %v105 = vunpack.c.l.b16 %v70
    %v106 = vunpack.c.h.b16 %v70
    %v107 = vunpack.c.l.b16 %v71
    %v108 = vunpack.c.h.b16 %v71
    %v109 = vunpack.c.l.b16 %v72
    %v110 = vunpack.c.h.b16 %v72
    %v111 = vunpack.c.l.b16 %v73
    %v112 = vunpack.c.h.b16 %v73
    %v113 = vunpack.c.l.b16 %v74
    %v114 = vunpack.c.h.b16 %v74
    %v115 = vpack.c.b16 %v107, %v103
    %v116 = vpack.c.b16 %v108, %v104
    %v117 = vpack.c.b16 %v109, %v105
    %v118 = vpack.c.b16 %v110, %v106
    %v119 = vpack.c.b16 %v111, %v111
    %v120 = vpack.c.b16 %v112, %v112
    %v121 = vpack.c.b16 %v113, %v113
    %v122 = vpack.c.b16 %v114, %v114
    %vm127 = vcmask 162816
    %v129 = vsel %vm127, %v68, 0
    %vm131 = vcmask 1041408
    %v133 = vsel %vm131, %v119, 0
    %v136 = vsel %vm131, %v120, 0
    %v139 = vsel %vm131, %v121, 0
    %v142 = vsel %vm131, %v122, 0
    %144 = vmatprep.subr.bf16.mxu0 %v116
    %145 = vmatpush1.bf16.msra.mxu0 %v115
    %146 = vmatprep.subr.bf16.mxu0 %v136
    %147 = vmatpush1.bf16.msra.mxu0 %v133
    %148 = vmatprep.subr.bf16.mxu0 0
    %149 = vmatpush1.bf16.msra.mxu0 0
    %150 = vmatprep.subr.bf16.mxu0 0
    %151 = vmatpush1.bf16.msra.mxu0 0
    %152 = vmatprep.subr.bf16.mxu0 0
    %153 = vmatpush1.bf16.msra.mxu0 0
    %154 = vmatprep.subr.bf16.mxu0 0
    %155 = vmatpush1.bf16.msra.mxu0 0
    %156 = vmatprep.subr.bf16.mxu0 0
    %157 = vmatpush1.bf16.msra.mxu0 0
    %158 = vmatprep.subr.bf16.mxu0 0
    %159 = vmatpush1.bf16.msra.mxu0 0
    %160 = vmatprep.subr.bf16.mxu0 0
    %161 = vmatpush1.bf16.msra.mxu0 0
    %162 = vmatprep.subr.bf16.mxu0 0
    %163 = vmatpush1.bf16.msra.mxu0 0
    %164 = vmatprep.subr.bf16.mxu0 0
    %165 = vmatpush1.bf16.msra.mxu0 0
    %166 = vmatprep.subr.bf16.mxu0 0
    %167 = vmatpush1.bf16.msra.mxu0 0
    %168 = vmatprep.subr.bf16.mxu0 0
    %169 = vmatpush1.bf16.msra.mxu0 0
    %170 = vmatprep.subr.bf16.mxu0 0
    %171 = vmatpush1.bf16.msra.mxu0 0
    %172 = vmatprep.subr.bf16.mxu0 0
    %173 = vmatpush1.bf16.msra.mxu0 0
    %174 = vmatprep.subr.bf16.mxu0 0
    %175 = vmatpush1.bf16.msra.mxu0 0
    %176 = vmatprep.mubr.bf16.mxu0 0
    %177 = vmatmul.mubr.bf16.gmra.mrb[0].mxu0 %v129
    %v178 = vpop.f32.mrb[0].mxu0
    %v179 = vadd.f32 %v80, %v178
    %v180 = vpop.f32.mrb[0].mxu0
    %v181 = vadd.f32 %v84, %v180
    %v182 = vpop.f32.mrb[0].mxu0
    %v183 = vpop.f32.mrb[0].mxu0
    %184 = vdwg.mxu0
    %185 = vmatprep.subr.bf16.mxu0 %v118
    %186 = vmatpush1.bf16.msra.mxu0 %v117
    %187 = vmatprep.subr.bf16.mxu0 %v142
    %188 = vmatpush1.bf16.msra.mxu0 %v139
    %189 = vmatprep.subr.bf16.mxu0 0
    %190 = vmatpush1.bf16.msra.mxu0 0
    %191 = vmatprep.subr.bf16.mxu0 0
    %192 = vmatpush1.bf16.msra.mxu0 0
    %193 = vmatprep.subr.bf16.mxu0 0
    %194 = vmatpush1.bf16.msra.mxu0 0
    %195 = vmatprep.subr.bf16.mxu0 0
    %196 = vmatpush1.bf16.msra.mxu0 0
    %197 = vmatprep.subr.bf16.mxu0 0
    %198 = vmatpush1.bf16.msra.mxu0 0
    %199 = vmatprep.subr.bf16.mxu0 0
    %200 = vmatpush1.bf16.msra.mxu0 0
    %201 = vmatprep.subr.bf16.mxu0 0
    %202 = vmatpush1.bf16.msra.mxu0 0
    %203 = vmatprep.subr.bf16.mxu0 0
    %204 = vmatpush1.bf16.msra.mxu0 0
    %205 = vmatprep.subr.bf16.mxu0 0
    %206 = vmatpush1.bf16.msra.mxu0 0
    %207 = vmatprep.subr.bf16.mxu0 0
    %208 = vmatpush1.bf16.msra.mxu0 0
    %209 = vmatprep.subr.bf16.mxu0 0
    %210 = vmatpush1.bf16.msra.mxu0 0
    %211 = vmatprep.subr.bf16.mxu0 0
    %212 = vmatpush1.bf16.msra.mxu0 0
    %213 = vmatprep.subr.bf16.mxu0 0
    %214 = vmatpush1.bf16.msra.mxu0 0
    %215 = vmatprep.subr.bf16.mxu0 0
    %216 = vmatpush1.bf16.msra.mxu0 0
    %217 = vmatprep.mubr.bf16.mxu0 0
    %218 = vmatmul.mubr.bf16.gmra.mrb[0].mxu0 %v129
    %v219 = vpop.f32.mrb[0].mxu0
    %v220 = vadd.f32 %v88, %v219
    %v221 = vpop.f32.mrb[0].mxu0
    %v222 = vadd.f32 %v92, %v221
    %v223 = vpop.f32.mrb[0].mxu0
    %v224 = vpop.f32.mrb[0].mxu0
    %225 = vdwg.mxu0
    %v226 = vmax.f32 %v179, 0.0
    %v227 = vmax.f32 %v181, 0.0
    %v228 = vmax.f32 %v220, 0.0
    %v229 = vmax.f32 %v222, 0.0
    %v230 = vpack.c.bf16 %v226, %v226
    %v231 = vpack.c.bf16 %v227, %v227
    %v232 = vpack.c.bf16 %v228, %v228
    %v233 = vpack.c.bf16 %v229, %v229
    %v234 = vld [vmem:[#allocation7] sm:$0xff]
    %v235 = vld [vmem:[#allocation7 + $0x8] sm:$0xf]
    %v236 = vld [vmem:[#allocation7 + $0xc] sm:$0xff]
    %v237 = vld [vmem:[#allocation7 + $0x14] sm:$0xf]
    %v238 = vld [vmem:[#allocation7 + $0x18] sm:$0xff]
    %v239 = vld [vmem:[#allocation7 + $0x20] sm:$0xf]
    %v240 = vld [vmem:[#allocation7 + $0x24] sm:$0xff]
    %v241 = vld [vmem:[#allocation7 + $0x2c] sm:$0xf]
    %v242 = vld [vmem:[#allocation7 + $0x30] sm:$0xff]
    %v243 = vld [vmem:[#allocation7 + $0x38] sm:$0xf]
    %v244 = vld [vmem:[#allocation7 + $0x3c] sm:$0xff]
    %v245 = vld [vmem:[#allocation7 + $0x44] sm:$0xf]
    %v246 = vld [vmem:[#allocation7 + $0x48] sm:$0xff]
    %v247 = vld [vmem:[#allocation7 + $0x50] sm:$0xf]
    %v248 = vld [vmem:[#allocation7 + $0x54] sm:$0xff]
    %v249 = vld [vmem:[#allocation7 + $0x5c] sm:$0xf]
    %v250 = vld [vmem:[#allocation7 + $0x60] sm:$0xff]
    %v251 = vld [vmem:[#allocation7 + $0x68] sm:$0xf]
    %v252 = vld [vmem:[#allocation7 + $0x6c] sm:$0xff]
    %v253 = vld [vmem:[#allocation7 + $0x74] sm:$0xf]
    %v254 = vld [vmem:[#allocation7 + $0x78] sm:$0xff]
    %v255 = vld [vmem:[#allocation7 + $0x80] sm:$0xf]
    %v256 = vld [vmem:[#allocation7 + $0x84] sm:$0xff]
    %v257 = vld [vmem:[#allocation7 + $0x8c] sm:$0xf]
    %v258 = vld [vmem:[#allocation7 + $0x90] sm:$0xff]
    %v259 = vld [vmem:[#allocation7 + $0x98] sm:$0xf]
    %v260 = vld [vmem:[#allocation7 + $0x9c] sm:$0xff]
    %v261 = vld [vmem:[#allocation7 + $0xa4] sm:$0xf]
    %v262 = vld [vmem:[#allocation7 + $0xa8] sm:$0xff]
    %v263 = vld [vmem:[#allocation7 + $0xb0] sm:$0xf]
    %v264 = vld [vmem:[#allocation7 + $0xb4] sm:$0xff]
    %v265 = vld [vmem:[#allocation7 + $0xbc] sm:$0xf]
    %v266 = vld [vmem:[#allocation7 + $0xc0] sm:$0xff]
    %v267 = vld [vmem:[#allocation7 + $0xc8] sm:$0xf]
    %v268 = vld [vmem:[#allocation7 + $0xcc] sm:$0xff]
    %v269 = vld [vmem:[#allocation7 + $0xd4] sm:$0xf]
    %v270 = vld [vmem:[#allocation7 + $0xd8] sm:$0xff]
    %v271 = vld [vmem:[#allocation7 + $0xe0] sm:$0xf]
    %v272 = vld [vmem:[#allocation7 + $0xe4] sm:$0xff]
    %v273 = vld [vmem:[#allocation7 + $0xec] sm:$0xf]
    %v274 = vld [vmem:[#allocation7 + $0xf0] sm:$0xff]
    %v275 = vld [vmem:[#allocation7 + $0xf8] sm:$0xf]
    %v276 = vld [vmem:[#allocation7 + $0xfc] sm:$0xff]
    %v277 = vld [vmem:[#allocation7 + $0x104] sm:$0xf]
    %v278 = vld [vmem:[#allocation7 + $0x108] sm:$0xff]
    %v279 = vld [vmem:[#allocation7 + $0x110] sm:$0xf]
    %v280 = vld [vmem:[#allocation7 + $0x114] sm:$0xff]
    %v281 = vld [vmem:[#allocation7 + $0x11c] sm:$0xf]
    %v282 = vld [vmem:[#allocation7 + $0x120] sm:$0xff]
    %v283 = vld [vmem:[#allocation7 + $0x128] sm:$0xf]
    %v284 = vld [vmem:[#allocation7 + $0x12c] sm:$0xff]
    %v285 = vld [vmem:[#allocation7 + $0x134] sm:$0xf]
    %v286 = vld [vmem:[#allocation7 + $0x138] sm:$0xff]
    %v287 = vld [vmem:[#allocation7 + $0x140] sm:$0xf]
    %v288 = vld [vmem:[#allocation7 + $0x144] sm:$0xff]
    %v289 = vld [vmem:[#allocation7 + $0x14c] sm:$0xf]
    %v290 = vld [vmem:[#allocation7 + $0x150] sm:$0xff]
    %v291 = vld [vmem:[#allocation7 + $0x158] sm:$0xf]
    %v292 = vld [vmem:[#allocation7 + $0x15c] sm:$0xff]
    %v293 = vld [vmem:[#allocation7 + $0x164] sm:$0xf]
    %v294 = vld [vmem:[#allocation7 + $0x168] sm:$0xff]
    %v295 = vld [vmem:[#allocation7 + $0x170] sm:$0xf]
    %v296 = vld [vmem:[#allocation7 + $0x174] sm:$0xff]
    %v297 = vld [vmem:[#allocation7 + $0x17c] sm:$0xf]
    %v298 = vld [vmem:[#allocation7 + $0x180] sm:$0xff]
    %v299 = vld [vmem:[#allocation7 + $0x188] sm:$0xf]
    %v300 = vld [vmem:[#allocation7 + $0x18c] sm:$0xff]
    %v301 = vld [vmem:[#allocation7 + $0x194] sm:$0xf]
    %v302 = vld [vmem:[#allocation7 + $0x198] sm:$0xff]
    %v303 = vld [vmem:[#allocation7 + $0x1a0] sm:$0xf]
    %v304 = vld [vmem:[#allocation7 + $0x1a4] sm:$0xff]
    %v305 = vld [vmem:[#allocation7 + $0x1ac] sm:$0xf]
    %v306 = vld [vmem:[#allocation7 + $0x1b0] sm:$0xff]
    %v307 = vld [vmem:[#allocation7 + $0x1b8] sm:$0xf]
    %v308 = vld [vmem:[#allocation7 + $0x1bc] sm:$0xff]
    %v309 = vld [vmem:[#allocation7 + $0x1c4] sm:$0xf]
    %v310 = vld [vmem:[#allocation7 + $0x1c8] sm:$0xff]
    %v311 = vld [vmem:[#allocation7 + $0x1d0] sm:$0xf]
    %v312 = vld [vmem:[#allocation7 + $0x1d4] sm:$0xff]
    %v313 = vld [vmem:[#allocation7 + $0x1dc] sm:$0xf]
    %v314 = vld [vmem:[#allocation7 + $0x1e0] sm:$0xff]
    %v315 = vld [vmem:[#allocation7 + $0x1e8] sm:$0xf]
    %v316 = vld [vmem:[#allocation7 + $0x1ec] sm:$0xff]
    %v317 = vld [vmem:[#allocation7 + $0x1f4] sm:$0xf]
    %v318 = vld [vmem:[#allocation7 + $0x1f8] sm:$0xff]
    %v319 = vld [vmem:[#allocation7 + $0x200] sm:$0xf]
    %v320 = vld [vmem:[#allocation7 + $0x204] sm:$0xff]
    %v321 = vld [vmem:[#allocation7 + $0x20c] sm:$0xf]
    %v322 = vld [vmem:[#allocation7 + $0x210] sm:$0xff]
    %v323 = vld [vmem:[#allocation7 + $0x218] sm:$0xf]
    %v324 = vld [vmem:[#allocation7 + $0x21c] sm:$0xff]
    %v325 = vld [vmem:[#allocation7 + $0x224] sm:$0xf]
    %v326 = vld [vmem:[#allocation7 + $0x228] sm:$0xff]
    %v327 = vld [vmem:[#allocation7 + $0x230] sm:$0xf]
    %v328 = vld [vmem:[#allocation7 + $0x234] sm:$0xff]
    %v329 = vld [vmem:[#allocation7 + $0x23c] sm:$0xf]
    %v330 = vld [vmem:[#allocation7 + $0x240] sm:$0xff]
    %v331 = vld [vmem:[#allocation7 + $0x248] sm:$0xf]
    %v332 = vld [vmem:[#allocation7 + $0x24c] sm:$0xff]
    %v333 = vld [vmem:[#allocation7 + $0x254] sm:$0xf]
    %v334 = vld [vmem:[%s4] sm:$0x7]
    %v336 = vlaneseq
    %v337 = vshrl.u32 %v336, 7
    %v338 = vsub.s32 0, %v337
    %v339 = vrot.slane %v334, %v338
    %v340 = vlaneseq
    %v341 = vshrl.u32 %v340, 7
    %v342 = vsub.s32 1, %v341
    %v343 = vrot.slane %v334, %v342
    %v344 = vlaneseq
    %v345 = vshrl.u32 %v344, 7
    %v346 = vsub.s32 2, %v345
    %v347 = vrot.slane %v334, %v346
    %v451 = vunpack.c.l.b16 %v234
    %v452 = vunpack.c.h.b16 %v234
    %v453 = vunpack.c.l.b16 %v235
    %v454 = vunpack.c.l.b16 %v236
    %v455 = vunpack.c.h.b16 %v236
    %v456 = vunpack.c.l.b16 %v237
    %v457 = vunpack.c.l.b16 %v238
    %v458 = vunpack.c.h.b16 %v238
    %v459 = vunpack.c.l.b16 %v239
    %v460 = vunpack.c.l.b16 %v240
    %v461 = vunpack.c.h.b16 %v240
    %v462 = vunpack.c.l.b16 %v241
    %v463 = vunpack.c.l.b16 %v242
    %v464 = vunpack.c.h.b16 %v242
    %v465 = vunpack.c.l.b16 %v243
    %v466 = vunpack.c.l.b16 %v244
    %v467 = vunpack.c.h.b16 %v244
    %v468 = vunpack.c.l.b16 %v245
    %v469 = vunpack.c.l.b16 %v246
    %v470 = vunpack.c.h.b16 %v246
    %v471 = vunpack.c.l.b16 %v247
    %v472 = vunpack.c.l.b16 %v248
    %v473 = vunpack.c.h.b16 %v248
    %v474 = vunpack.c.l.b16 %v249
    %v475 = vunpack.c.l.b16 %v250
    %v476 = vunpack.c.h.b16 %v250
    %v477 = vunpack.c.l.b16 %v251
    %v478 = vunpack.c.l.b16 %v252
    %v479 = vunpack.c.h.b16 %v252
    %v480 = vunpack.c.l.b16 %v253
    %v481 = vunpack.c.l.b16 %v254
    %v482 = vunpack.c.h.b16 %v254
    %v483 = vunpack.c.l.b16 %v255
    %v484 = vunpack.c.l.b16 %v256
    %v485 = vunpack.c.h.b16 %v256
    %v486 = vunpack.c.l.b16 %v257
    %v487 = vunpack.c.l.b16 %v258
    %v488 = vunpack.c.h.b16 %v258
    %v489 = vunpack.c.l.b16 %v259
    %v490 = vunpack.c.l.b16 %v260
    %v491 = vunpack.c.h.b16 %v260
    %v492 = vunpack.c.l.b16 %v261
    %v493 = vunpack.c.l.b16 %v262
    %v494 = vunpack.c.h.b16 %v262
    %v495 = vunpack.c.l.b16 %v263
    %v496 = vunpack.c.l.b16 %v264
    %v497 = vunpack.c.h.b16 %v264
    %v498 = vunpack.c.l.b16 %v265
    %v499 = vunpack.c.l.b16 %v266
    %v500 = vunpack.c.h.b16 %v266
    %v501 = vunpack.c.l.b16 %v267
    %v502 = vunpack.c.l.b16 %v268
    %v503 = vunpack.c.h.b16 %v268
    %v504 = vunpack.c.l.b16 %v269
    %v505 = vunpack.c.l.b16 %v270
    %v506 = vunpack.c.h.b16 %v270
    %v507 = vunpack.c.l.b16 %v271
    %v508 = vunpack.c.l.b16 %v272
    %v509 = vunpack.c.h.b16 %v272
    %v510 = vunpack.c.l.b16 %v273
    %v511 = vunpack.c.l.b16 %v274
    %v512 = vunpack.c.h.b16 %v274
    %v513 = vunpack.c.l.b16 %v275
    %v514 = vunpack.c.l.b16 %v276
    %v515 = vunpack.c.h.b16 %v276
    %v516 = vunpack.c.l.b16 %v277
    %v517 = vunpack.c.l.b16 %v278
    %v518 = vunpack.c.h.b16 %v278
    %v519 = vunpack.c.l.b16 %v279
    %v520 = vunpack.c.l.b16 %v280
    %v521 = vunpack.c.h.b16 %v280
    %v522 = vunpack.c.l.b16 %v281
    %v523 = vunpack.c.l.b16 %v282
    %v524 = vunpack.c.h.b16 %v282
    %v525 = vunpack.c.l.b16 %v283
    %v526 = vunpack.c.l.b16 %v284
    %v527 = vunpack.c.h.b16 %v284
    %v528 = vunpack.c.l.b16 %v285
    %v529 = vunpack.c.l.b16 %v286
    %v530 = vunpack.c.h.b16 %v286
    %v531 = vunpack.c.l.b16 %v287
    %v532 = vunpack.c.l.b16 %v288
    %v533 = vunpack.c.h.b16 %v288
    %v534 = vunpack.c.l.b16 %v289
    %v535 = vunpack.c.l.b16 %v290
    %v536 = vunpack.c.h.b16 %v290
    %v537 = vunpack.c.l.b16 %v291
    %v538 = vunpack.c.l.b16 %v292
    %v539 = vunpack.c.h.b16 %v292
    %v540 = vunpack.c.l.b16 %v293
    %v541 = vunpack.c.l.b16 %v294
    %v542 = vunpack.c.h.b16 %v294
    %v543 = vunpack.c.l.b16 %v295
    %v544 = vunpack.c.l.b16 %v296
    %v545 = vunpack.c.h.b16 %v296
    %v546 = vunpack.c.l.b16 %v297
    %v547 = vunpack.c.l.b16 %v298
    %v548 = vunpack.c.h.b16 %v298
    %v549 = vunpack.c.l.b16 %v299
    %v550 = vunpack.c.l.b16 %v300
    %v551 = vunpack.c.h.b16 %v300
    %v552 = vunpack.c.l.b16 %v301
    %v553 = vunpack.c.l.b16 %v302
    %v554 = vunpack.c.h.b16 %v302
    %v555 = vunpack.c.l.b16 %v303
    %v556 = vunpack.c.l.b16 %v304
    %v557 = vunpack.c.h.b16 %v304
    %v558 = vunpack.c.l.b16 %v305
    %v559 = vunpack.c.l.b16 %v306
    %v560 = vunpack.c.h.b16 %v306
    %v561 = vunpack.c.l.b16 %v307
    %v562 = vunpack.c.l.b16 %v308
    %v563 = vunpack.c.h.b16 %v308
    %v564 = vunpack.c.l.b16 %v309
    %v565 = vunpack.c.l.b16 %v310
    %v566 = vunpack.c.h.b16 %v310
    %v567 = vunpack.c.l.b16 %v311
    %v568 = vunpack.c.l.b16 %v312
    %v569 = vunpack.c.h.b16 %v312
    %v570 = vunpack.c.l.b16 %v313
    %v571 = vunpack.c.l.b16 %v314
    %v572 = vunpack.c.h.b16 %v314
    %v573 = vunpack.c.l.b16 %v315
    %v574 = vunpack.c.l.b16 %v316
    %v575 = vunpack.c.h.b16 %v316
    %v576 = vunpack.c.l.b16 %v317
    %v577 = vunpack.c.l.b16 %v318
    %v578 = vunpack.c.h.b16 %v318
    %v579 = vunpack.c.l.b16 %v319
    %v580 = vunpack.c.l.b16 %v320
    %v581 = vunpack.c.h.b16 %v320
    %v582 = vunpack.c.l.b16 %v321
    %v583 = vunpack.c.l.b16 %v322
    %v584 = vunpack.c.h.b16 %v322
    %v585 = vunpack.c.l.b16 %v323
    %v586 = vunpack.c.l.b16 %v324
    %v587 = vunpack.c.h.b16 %v324
    %v588 = vunpack.c.l.b16 %v325
    %v589 = vunpack.c.l.b16 %v326
    %v590 = vunpack.c.h.b16 %v326
    %v591 = vunpack.c.l.b16 %v327
    %v592 = vunpack.c.l.b16 %v328
    %v593 = vunpack.c.h.b16 %v328
    %v594 = vunpack.c.l.b16 %v329
    %v595 = vunpack.c.l.b16 %v330
    %v596 = vunpack.c.h.b16 %v330
    %v597 = vunpack.c.l.b16 %v331
    %v598 = vunpack.c.l.b16 %v332
    %v599 = vunpack.c.h.b16 %v332
    %v600 = vunpack.c.l.b16 %v333
    %v601 = vpack.c.b16 %v454, %v451
    %v602 = vpack.c.b16 %v455, %v452
    %v603 = vpack.c.b16 %v456, %v453
    %v604 = vpack.c.b16 %v460, %v457
    %v605 = vpack.c.b16 %v461, %v458
    %v606 = vpack.c.b16 %v462, %v459
    %v607 = vpack.c.b16 %v466, %v463
    %v608 = vpack.c.b16 %v467, %v464
    %v609 = vpack.c.b16 %v468, %v465
    %v610 = vpack.c.b16 %v472, %v469
    %v611 = vpack.c.b16 %v473, %v470
    %v612 = vpack.c.b16 %v474, %v471
    %v613 = vpack.c.b16 %v478, %v475
    %v614 = vpack.c.b16 %v479, %v476
    %v615 = vpack.c.b16 %v480, %v477
    %v616 = vpack.c.b16 %v484, %v481
    %v617 = vpack.c.b16 %v485, %v482
    %v618 = vpack.c.b16 %v486, %v483
    %v619 = vpack.c.b16 %v490, %v487
    %v620 = vpack.c.b16 %v491, %v488
    %v621 = vpack.c.b16 %v492, %v489
    %v622 = vpack.c.b16 %v496, %v493
    %v623 = vpack.c.b16 %v497, %v494
    %v624 = vpack.c.b16 %v498, %v495
    %v625 = vpack.c.b16 %v502, %v499
    %v626 = vpack.c.b16 %v503, %v500
    %v627 = vpack.c.b16 %v504, %v501
    %v628 = vpack.c.b16 %v508, %v505
    %v629 = vpack.c.b16 %v509, %v506
    %v630 = vpack.c.b16 %v510, %v507
    %v631 = vpack.c.b16 %v514, %v511
    %v632 = vpack.c.b16 %v515, %v512
    %v633 = vpack.c.b16 %v516, %v513
    %v634 = vpack.c.b16 %v520, %v517
    %v635 = vpack.c.b16 %v521, %v518
    %v636 = vpack.c.b16 %v522, %v519
    %v637 = vpack.c.b16 %v526, %v523
    %v638 = vpack.c.b16 %v527, %v524
    %v639 = vpack.c.b16 %v528, %v525
    %v640 = vpack.c.b16 %v532, %v529
    %v641 = vpack.c.b16 %v533, %v530
    %v642 = vpack.c.b16 %v534, %v531
    %v643 = vpack.c.b16 %v538, %v535
    %v644 = vpack.c.b16 %v539, %v536
    %v645 = vpack.c.b16 %v540, %v537
    %v646 = vpack.c.b16 %v544, %v541
    %v647 = vpack.c.b16 %v545, %v542
    %v648 = vpack.c.b16 %v546, %v543
    %v649 = vpack.c.b16 %v550, %v547
    %v650 = vpack.c.b16 %v551, %v548
    %v651 = vpack.c.b16 %v552, %v549
    %v652 = vpack.c.b16 %v556, %v553
    %v653 = vpack.c.b16 %v557, %v554
    %v654 = vpack.c.b16 %v558, %v555
    %v655 = vpack.c.b16 %v562, %v559
    %v656 = vpack.c.b16 %v563, %v560
    %v657 = vpack.c.b16 %v564, %v561
    %v658 = vpack.c.b16 %v568, %v565
    %v659 = vpack.c.b16 %v569, %v566
    %v660 = vpack.c.b16 %v570, %v567
    %v661 = vpack.c.b16 %v574, %v571
    %v662 = vpack.c.b16 %v575, %v572
    %v663 = vpack.c.b16 %v576, %v573
    %v664 = vpack.c.b16 %v580, %v577
    %v665 = vpack.c.b16 %v581, %v578
    %v666 = vpack.c.b16 %v582, %v579
    %v667 = vpack.c.b16 %v586, %v583
    %v668 = vpack.c.b16 %v587, %v584
    %v669 = vpack.c.b16 %v588, %v585
    %v670 = vpack.c.b16 %v592, %v589
    %v671 = vpack.c.b16 %v593, %v590
    %v672 = vpack.c.b16 %v594, %v591
    %v673 = vpack.c.b16 %v598, %v595
    %v674 = vpack.c.b16 %v599, %v596
    %v675 = vpack.c.b16 %v600, %v597
    %vm751 = vcmask 130048
    %v753 = vsel %vm751, %v233, 0
    %755 = vmatprep.subr.bf16.mxu0 %v602
    %756 = vmatpush1.bf16.msra.mxu0 %v601
    %757 = vmatprep.subr.bf16.mxu0 %v605
    %758 = vmatpush1.bf16.msra.mxu0 %v604
    %759 = vmatprep.subr.bf16.mxu0 %v608
    %760 = vmatpush1.bf16.msra.mxu0 %v607
    %761 = vmatprep.subr.bf16.mxu0 %v611
    %762 = vmatpush1.bf16.msra.mxu0 %v610
    %763 = vmatprep.subr.bf16.mxu0 %v614
    %764 = vmatpush1.bf16.msra.mxu0 %v613
    %765 = vmatprep.subr.bf16.mxu0 %v617
    %766 = vmatpush1.bf16.msra.mxu0 %v616
    %767 = vmatprep.subr.bf16.mxu0 %v620
    %768 = vmatpush1.bf16.msra.mxu0 %v619
    %769 = vmatprep.subr.bf16.mxu0 %v623
    %770 = vmatpush1.bf16.msra.mxu0 %v622
    %771 = vmatprep.subr.bf16.mxu0 %v626
    %772 = vmatpush1.bf16.msra.mxu0 %v625
    %773 = vmatprep.subr.bf16.mxu0 %v629
    %774 = vmatpush1.bf16.msra.mxu0 %v628
    %775 = vmatprep.subr.bf16.mxu0 %v632
    %776 = vmatpush1.bf16.msra.mxu0 %v631
    %777 = vmatprep.subr.bf16.mxu0 %v635
    %778 = vmatpush1.bf16.msra.mxu0 %v634
    %779 = vmatprep.subr.bf16.mxu0 %v638
    %780 = vmatpush1.bf16.msra.mxu0 %v637
    %781 = vmatprep.subr.bf16.mxu0 %v641
    %782 = vmatpush1.bf16.msra.mxu0 %v640
    %783 = vmatprep.subr.bf16.mxu0 %v644
    %784 = vmatpush1.bf16.msra.mxu0 %v643
    %785 = vmatprep.subr.bf16.mxu0 %v647
    %786 = vmatpush1.bf16.msra.mxu0 %v646
    %787 = vmatprep.mubr.bf16.mxu0 %v231
    %788 = vmatmul.mubr.bf16.gmra.mrb[0].mxu0 %v230
    %v789 = vpop.f32.mrb[0].mxu0
    %v790 = vadd.f32 %v339, %v789
    %v791 = vpop.f32.mrb[0].mxu0
    %v792 = vadd.f32 %v343, %v791
    %v793 = vpop.f32.mrb[0].mxu0
    %v794 = vpop.f32.mrb[0].mxu0
    %795 = vdwg.mxu0
    %796 = vmatprep.subr.bf16.mxu0 %v650
    %797 = vmatpush1.bf16.msra.mxu0 %v649
    %798 = vmatprep.subr.bf16.mxu0 %v653
    %799 = vmatpush1.bf16.msra.mxu0 %v652
    %800 = vmatprep.subr.bf16.mxu0 %v656
    %801 = vmatpush1.bf16.msra.mxu0 %v655
    %802 = vmatprep.subr.bf16.mxu0 %v659
    %803 = vmatpush1.bf16.msra.mxu0 %v658
    %804 = vmatprep.subr.bf16.mxu0 %v662
    %805 = vmatpush1.bf16.msra.mxu0 %v661
    %806 = vmatprep.subr.bf16.mxu0 %v665
    %807 = vmatpush1.bf16.msra.mxu0 %v664
    %808 = vmatprep.subr.bf16.mxu0 %v668
    %809 = vmatpush1.bf16.msra.mxu0 %v667
    %810 = vmatprep.subr.bf16.mxu0 %v671
    %811 = vmatpush1.bf16.msra.mxu0 %v670
    %812 = vmatprep.subr.bf16.mxu0 %v674
    %813 = vmatpush1.bf16.msra.mxu0 %v673
    %814 = vmatprep.subr.bf16.mxu0 0
    %815 = vmatpush1.bf16.msra.mxu0 0
    %816 = vmatprep.subr.bf16.mxu0 0
    %817 = vmatpush1.bf16.msra.mxu0 0
    %818 = vmatprep.subr.bf16.mxu0 0
    %819 = vmatpush1.bf16.msra.mxu0 0
    %820 = vmatprep.subr.bf16.mxu0 0
    %821 = vmatpush1.bf16.msra.mxu0 0
    %822 = vmatprep.subr.bf16.mxu0 0
    %823 = vmatpush1.bf16.msra.mxu0 0
    %824 = vmatprep.subr.bf16.mxu0 0
    %825 = vmatpush1.bf16.msra.mxu0 0
    %826 = vmatprep.subr.bf16.mxu0 0
    %827 = vmatpush1.bf16.msra.mxu0 0
    %828 = vmatprep.mubr.bf16.mxu0 %v753
    %829 = vmatmul.mubr.bf16.gmra.mrb[0].mxu0 %v232
    %v830 = vpop.f32.mrb[0].mxu0
    %v831 = vadd.f32 %v790, %v830
    %v832 = vpop.f32.mrb[0].mxu0
    %v833 = vadd.f32 %v792, %v832
    %v834 = vpop.f32.mrb[0].mxu0
    %v835 = vpop.f32.mrb[0].mxu0
    %836 = vdwg.mxu0
    %837 = vmatprep.subr.bf16.mxu0 0
    %838 = vmatpush1.bf16.msra.mxu0 %v603
    %839 = vmatprep.subr.bf16.mxu0 0
    %840 = vmatpush1.bf16.msra.mxu0 %v606
    %841 = vmatprep.subr.bf16.mxu0 0
    %842 = vmatpush1.bf16.msra.mxu0 %v609
    %843 = vmatprep.subr.bf16.mxu0 0
    %844 = vmatpush1.bf16.msra.mxu0 %v612
    %845 = vmatprep.subr.bf16.mxu0 0
    %846 = vmatpush1.bf16.msra.mxu0 %v615
    %847 = vmatprep.subr.bf16.mxu0 0
    %848 = vmatpush1.bf16.msra.mxu0 %v618
    %849 = vmatprep.subr.bf16.mxu0 0
    %850 = vmatpush1.bf16.msra.mxu0 %v621
    %851 = vmatprep.subr.bf16.mxu0 0
    %852 = vmatpush1.bf16.msra.mxu0 %v624
    %853 = vmatprep.subr.bf16.mxu0 0
    %854 = vmatpush1.bf16.msra.mxu0 %v627
    %855 = vmatprep.subr.bf16.mxu0 0
    %856 = vmatpush1.bf16.msra.mxu0 %v630
    %857 = vmatprep.subr.bf16.mxu0 0
    %858 = vmatpush1.bf16.msra.mxu0 %v633
    %859 = vmatprep.subr.bf16.mxu0 0
    %860 = vmatpush1.bf16.msra.mxu0 %v636
    %861 = vmatprep.subr.bf16.mxu0 0
    %862 = vmatpush1.bf16.msra.mxu0 %v639
    %863 = vmatprep.subr.bf16.mxu0 0
    %864 = vmatpush1.bf16.msra.mxu0 %v642
    %865 = vmatprep.subr.bf16.mxu0 0
    %866 = vmatpush1.bf16.msra.mxu0 %v645
    %867 = vmatprep.subr.bf16.mxu0 0
    %868 = vmatpush1.bf16.msra.mxu0 %v648
    %869 = vmatprep.mubr.bf16.mxu0 %v231
    %870 = vmatmul.mubr.bf16.gmra.mrb[0].mxu0 %v230
    %v871 = vpop.f32.mrb[0].mxu0
    %v872 = vadd.f32 %v347, %v871
    %v873 = vpop.f32.mrb[0].mxu0
    %v874 = vpop.f32.mrb[0].mxu0
    %v875 = vpop.f32.mrb[0].mxu0
    %876 = vdwg.mxu0
    %877 = vmatprep.subr.bf16.mxu0 0
    %878 = vmatpush1.bf16.msra.mxu0 %v651
    %879 = vmatprep.subr.bf16.mxu0 0
    %880 = vmatpush1.bf16.msra.mxu0 %v654
    %881 = vmatprep.subr.bf16.mxu0 0
    %882 = vmatpush1.bf16.msra.mxu0 %v657
    %883 = vmatprep.subr.bf16.mxu0 0
    %884 = vmatpush1.bf16.msra.mxu0 %v660
    %885 = vmatprep.subr.bf16.mxu0 0
    %886 = vmatpush1.bf16.msra.mxu0 %v663
    %887 = vmatprep.subr.bf16.mxu0 0
    %888 = vmatpush1.bf16.msra.mxu0 %v666
    %889 = vmatprep.subr.bf16.mxu0 0
    %890 = vmatpush1.bf16.msra.mxu0 %v669
    %891 = vmatprep.subr.bf16.mxu0 0
    %892 = vmatpush1.bf16.msra.mxu0 %v672
    %893 = vmatprep.subr.bf16.mxu0 0
    %894 = vmatpush1.bf16.msra.mxu0 %v675
    %895 = vmatprep.subr.bf16.mxu0 0
    %896 = vmatpush1.bf16.msra.mxu0 0
    %897 = vmatprep.subr.bf16.mxu0 0
    %898 = vmatpush1.bf16.msra.mxu0 0
    %899 = vmatprep.subr.bf16.mxu0 0
    %900 = vmatpush1.bf16.msra.mxu0 0
    %901 = vmatprep.subr.bf16.mxu0 0
    %902 = vmatpush1.bf16.msra.mxu0 0
    %903 = vmatprep.subr.bf16.mxu0 0
    %904 = vmatpush1.bf16.msra.mxu0 0
    %905 = vmatprep.subr.bf16.mxu0 0
    %906 = vmatpush1.bf16.msra.mxu0 0
    %907 = vmatprep.subr.bf16.mxu0 0
    %908 = vmatpush1.bf16.msra.mxu0 0
    %909 = vmatprep.mubr.bf16.mxu0 %v753
    %910 = vmatmul.mubr.bf16.gmra.mrb[0].mxu0 %v232
    %v911 = vpop.f32.mrb[0].mxu0
    %v912 = vadd.f32 %v872, %v911
    %v913 = vpop.f32.mrb[0].mxu0
    %v914 = vpop.f32.mrb[0].mxu0
    %v915 = vpop.f32.mrb[0].mxu0
    %916 = vdwg.mxu0
    %v917 = vmax.f32 %v831, 0.0
    %v918 = vmax.f32 %v833, 0.0
    %v919 = vmax.f32 %v912, 0.0
    %v920 = vld [vmem:[%s5] sm:$0x7]
    %v922 = vlaneseq
    %v923 = vshrl.u32 %v922, 7
    %v924 = vsub.s32 0, %v923
    %v925 = vrot.slane %v920, %v924
    %v926 = vlaneseq
    %v927 = vshrl.u32 %v926, 7
    %v928 = vsub.s32 1, %v927
    %v929 = vrot.slane %v920, %v928
    %v930 = vlaneseq
    %v931 = vshrl.u32 %v930, 7
    %v932 = vsub.s32 2, %v931
    %v933 = vrot.slane %v920, %v932
    %v937 = vmul.f32 %v917, %v925
    %v938 = vmul.f32 %v918, %v929
    %v939 = vmul.f32 %v919, %v933
    %v940 = vadd.f32 %v937, %v938
    %vm941 = vcmask 359424
    %v942 = vsel %vm941, %v939, 0.0
    %v943 = vadd.f32 %v940, %v942
    %944 = vadd.xlane.f32.xlu0 %v943
    %v945 = vpop.xlane.xlu0 %944
    %v946 = vld [vmem:[#allocation2] sm:$0x1]
    %v948 = vlaneseq
    %v949 = vshrl.u32 %v948, 7
    %v950 = vsub.s32 0, %v949
    %v951 = vrot.slane %v946, %v950
    %v953 = vadd.f32 %v945, %v951
    %vm954 = vcmask 7168
    %955 = vst.msk [vmem:[%s7] sm:$0xff] %vm954, %v953
    // Predicated region
    $region42: #{tpu_custom_call.1} parent=1 // pred_check
      _
    $region43: #{tpu_custom_call.1} parent=1 // pred_check_branch
      %957 = sbr.rel (0) target = $region45
    $region44: #{tpu_custom_call.1} parent=1 // pred_region
      _
    $region45: #{tpu_custom_call.1} parent=1 // pred_fallthru
      _
    // Predicated region
    $region46: #{tpu_custom_call.1} parent=1 // pred_check
      _
    $region47: #{tpu_custom_call.1} parent=1 // pred_check_branch
      %959 = sbr.rel (0) target = $region49
    $region48: #{tpu_custom_call.1} parent=1 // pred_region
      _
    $region49: #{tpu_custom_call.1} parent=1 // pred_fallthru
      _
    %960 = vsyncpa [#allocation4], 1
    %961 = vsyncpa [#allocation6], 1

</llo_original>
